<compile_context>
chip_gen: v7x
topology: tpu7x:2x2x1
jax: 0.10.0
libtpu: 0.0.40
codegen_flags: <defaults>
</compile_context>

<pallas_src>
import functools

import jax
import jax.numpy as jnp
from jax.experimental import pallas as pl
from jax.experimental.pallas import tpu as pltpu


# --------------------------- kernel 1: projection + scores ---------------------------
def _gat_project_kernel(h_ref, w_ref, attn_ref, ind_ref, zaug_ref, scores_ref):
    """z_aug = h @ W_aug (bf16 MXU) + per-head ones column; scores = z @ block-diag attn."""
    h = h_ref[...].astype(jnp.bfloat16)
    w = w_ref[...].astype(jnp.bfloat16)
    z = jnp.dot(h, w, preferred_element_type=jnp.float32)      # (N, H*(F+1)); ones cols are 0
    # One tiny matmul yields ALL heads' el/er scores -> (N, 2H); no per-head passes over z.
    scores_ref[...] = jnp.dot(z, attn_ref[...], preferred_element_type=jnp.float32)
    # Fold the softmax-denominator "ones" column into z_aug (free MXU lanes later).
    zaug_ref[...] = (z + ind_ref[...]).astype(zaug_ref.dtype)


# ----------------------- kernel 2: masked softmax + aggregation ----------------------
def _gat_attention_kernel(adj_ref, er_ref, el_ref, zaug_ref, b_ref, out_ref, *,
                          num_heads, f_out, negative_slope, is_last):
    H, F = num_heads, f_out
    fa = F + 1

    adj = adj_ref[...]                                          # (TM, N) int8, adj[dst, src]
    # The ONLY (TM, N)-sized mask buffer: additive bias reused by every head.  No `* adj`
    # multiply anywhere; zero-in-degree is handled by the (TM, 1) post-scale below.
    mask_bias = jnp.where(adj > 0, 0.0, -1e30)                  # (TM, N) f32
    # Row has >=1 in-edge  <=>  max of its mask row is 0.0 (not -1e30).
    has_in_edge = jnp.max(mask_bias, axis=-1, keepdims=True) > -1.0   # (TM, 1)

    er = er_ref[...]                                            # (TM, H) destination scores
    el = el_ref[...]                                            # (H, N)  source scores
    zaug = zaug_ref[...]                                        # (N, H*(F+1)) bf16
    b = b_ref[...]                                              # (H, F)

    acc = None
    for hh in range(H):                                         # short unrolled head loop
        e = er[:, hh:hh + 1] + el[hh:hh + 1, :]                 # (TM, N)
        e = jnp.maximum(e, negative_slope * e)                  # LeakyReLU
        e = e + mask_bias                                       # additive mask only
        m = jnp.max(e, axis=-1, keepdims=True)
        # TODO(synk): a bf16 exp (v6e/v7x EUP) is a further option; kept f32 for accuracy.
        p = jnp.exp(e - m)                                      # masked entries underflow to 0
        # One bf16 MXU matmul returns BOTH the aggregation and the softmax denominator
        # (ones column in z_aug); normalization happens AFTER the matmul on (TM, F).
        pz = jnp.dot(p.astype(jnp.bfloat16), zaug[:, hh * fa:(hh + 1) * fa],
                     preferred_element_type=jnp.float32)        # (TM, F+1)
        denom = pz[:, F:F + 1]                                  # (TM, 1)
        inv = jnp.where(has_in_edge, pl.reciprocal(denom, approx=True), 0.0)
        rst = pz[:, :F] * inv + b[hh:hh + 1, :]                 # (TM, F)

        if is_last:
            acc = rst if acc is None else acc + rst             # in-kernel head mean
        else:
            rst = jnp.where(rst > 0, rst, jnp.exp(rst) - 1.0)   # ELU(alpha=1)
            out_ref[:, hh * F:(hh + 1) * F] = rst.astype(out_ref.dtype)  # lane-dense concat

    if is_last:
        out_ref[...] = (acc * (1.0 / H)).astype(out_ref.dtype)


# ------------------------------------ wrapper ----------------------------------------
def _pick_block_m(n):
    # Largest dst-row tile that divides N; 32 also satisfies int8 second-minor packing.
    for bm in (512, 256, 128, 64, 32):
        if n % bm == 0:
            return bm
    return n


def gat_forward(x, adj, params, *, negative_slope=0.2, block_m=None):
    """GAT.forward: hidden GATConv layers (ELU, concat heads) + output layer (mean heads).

    params: list of (w (H, Din, F), attn_l (H, 1, F), attn_r (H, 1, F), bias (H, 1, F)).
    adj[dst, src] != 0  <=>  edge src -> dst (softmax over incoming edges).
    """
    N = x.shape[0]
    adj_i8 = (adj > 0).astype(jnp.int8)        # compact adjacency: 4x less DMA/VMEM than f32
    if block_m is None:
        block_m = _pick_block_m(N)
    assert N % block_m == 0, "destination-row block must divide N"

    h = x.astype(jnp.float32)
    n_layers = len(params)
    for l, (w, al, ar, b) in enumerate(params):
        H, Din, F = w.shape
        is_last = (l == n_layers - 1)

        # ---- host-side parameter packing (once per layer; pure layout plumbing) ----
        w_p = jnp.transpose(w, (1, 0, 2))                                    # (Din, H, F)
        w_aug = jnp.concatenate([w_p, jnp.zeros((Din, H, 1), w.dtype)], -1)  # (Din, H, F+1)
        w_aug = w_aug.reshape(Din, H * (F + 1))
        ones_ind = jnp.tile(
            jnp.concatenate([jnp.zeros((1, F), jnp.float32),
                             jnp.ones((1, 1), jnp.float32)], axis=1), (1, H))  # (1, H*(F+1))
        # Block-diagonal attention projections -> all heads' el/er in one matmul.
        a_l = jnp.concatenate([al.reshape(H, F), jnp.zeros((H, 1), jnp.float32)], -1)
        a_r = jnp.concatenate([ar.reshape(H, F), jnp.zeros((H, 1), jnp.float32)], -1)
        eye = jnp.eye(H, dtype=jnp.float32)
        A_l = (a_l[:, :, None] * eye[:, None, :]).reshape(H * (F + 1), H)
        A_r = (a_r[:, :, None] * eye[:, None, :]).reshape(H * (F + 1), H)
        attn_bd = jnp.concatenate([A_l, A_r], axis=1)                        # (H*(F+1), 2H)

        # ---- kernel 1: projection + attention scores (whole graph; tiny arrays) ----
        zaug, scores = pl.pallas_call(
            _gat_project_kernel,
            out_shape=(jax.ShapeDtypeStruct((N, H * (F + 1)), jnp.bfloat16),
                       jax.ShapeDtypeStruct((N, 2 * H), jnp.float32)),
            compiler_params=pltpu.CompilerParams(vmem_limit_bytes=32 * 1024 * 1024),
        )(h, w_aug, attn_bd, ones_ind)

        el_src = scores[:, :H].T          # (H, N): transposed ONCE per layer
        er_dst = scores[:, H:2 * H]       # (N, H)

        # ---- kernel 2: masked softmax + aggregation, gridded over destination rows ----
        out_w = F if is_last else H * F
        kernel = functools.partial(_gat_attention_kernel, num_heads=H, f_out=F,
                                   negative_slope=negative_slope, is_last=is_last)
        out = pl.pallas_call(
            kernel,
            out_shape=jax.ShapeDtypeStruct((N, out_w), jnp.float32),
            grid_spec=pltpu.PrefetchScalarGridSpec(
                num_scalar_prefetch=0,
                grid=(N // block_m,),
                in_specs=[
                    pl.BlockSpec((block_m, N), lambda i: (i, 0)),        # adj rows (int8)
                    pl.BlockSpec((block_m, H), lambda i: (i, 0)),        # er (dst scores)
                    pl.BlockSpec((H, N), lambda i: (0, 0)),              # el (src scores)
                    pl.BlockSpec((N, H * (F + 1)), lambda i: (0, 0)),    # z_aug (bf16)
                    pl.BlockSpec((H, F), lambda i: (0, 0)),              # bias
                ],
                out_specs=pl.BlockSpec((block_m, out_w), lambda i: (i, 0)),
            ),
            compiler_params=pltpu.CompilerParams(
                dimension_semantics=("parallel",),        # use both TensorCores on v7x
                vmem_limit_bytes=32 * 1024 * 1024),
        )(adj_i8, er_dst, el_src, zaug, b.reshape(H, F))

        if is_last:
            return out
        h = out                                          # (N, H*F), lane-dense head concat
    # TODO(synk): last-layer per-head matmul fusion along the contraction axis (head MEAN
    #             trick) not applied; heads are accumulated in-kernel instead.


# ----------------------- pure-JAX reference (for checking) -----------------------
def _ref_conv(x, adj, w, al, ar, b, neg_slope, elu):
    z = jnp.einsum('nd,hdf->nhf', x, w)                      # (N, H, F)
    el = jnp.sum(z * al[:, 0][None, :, :], axis=-1)          # (N, H) src
    er = jnp.sum(z * ar[:, 0][None, :, :], axis=-1)          # (N, H) dst
    e = er[:, None, :] + el[None, :, :]                      # (Ndst, Nsrc, H)
    e = jnp.where(e > 0, e, neg_slope * e)
    mask = (adj > 0)[:, :, None]
    e = jnp.where(mask, e, -1e30)
    m = jnp.max(e, axis=1, keepdims=True)
    p = jnp.where(mask, jnp.exp(e - m), 0.0)
    denom = jnp.sum(p, axis=1, keepdims=True)
    alpha = p / jnp.where(denom > 0, denom, 1.0)
    rst = jnp.einsum('nmh,mhf->nhf', alpha, z) + b[:, 0][None, :, :]
    if elu:
        rst = jnp.where(rst > 0, rst, jnp.exp(rst) - 1.0)
    return rst                                               # (N, H, F)


def gat_forward_ref(x, adj, params, *, negative_slope=0.2):
    h = x
    for l in range(len(params) - 1):
        w, al, ar, b = params[l]
        out = _ref_conv(h, adj, w, al, ar, b, negative_slope, True)
        N, H, F = out.shape
        h = out.reshape(N, H * F)
    w, al, ar, b = params[-1]
    out = _ref_conv(h, adj, w, al, ar, b, negative_slope, False)
    return jnp.mean(out, axis=1)


# --------------------------------------- main ---------------------------------------
if __name__ == "__main__":
    # Model config (small, shapes consistent with GAT.__init__)
    num_layers = 2
    in_dim = 16
    num_hidden = 16
    num_classes = 8
    num_heads = [4, 2]       # [hidden heads, output heads]
    N = 64                   # number of graph nodes

    key = jax.random.PRNGKey(0)
    k_x, k_adj, *k_params = jax.random.split(key, 2 + 8)

    # Node features
    x = jax.random.normal(k_x, (N, in_dim), dtype=jnp.float32)

    # Random directed graph with self-loops; adj[dst, src] = 1 if edge src->dst
    adj = (jax.random.uniform(k_adj, (N, N)) < 0.3).astype(jnp.float32)
    adj = jnp.maximum(adj, jnp.eye(N, dtype=jnp.float32))

    def layer_params(keys, din, fout, heads):
        kw, kl, kr, kb = keys
        scale = 1.0 / jnp.sqrt(jnp.float32(din))
        w = jax.random.normal(kw, (heads, din, fout), jnp.float32) * scale
        al = jax.random.normal(kl, (heads, 1, fout), jnp.float32) * 0.1
        ar = jax.random.normal(kr, (heads, 1, fout), jnp.float32) * 0.1
        b = jax.random.normal(kb, (heads, 1, fout), jnp.float32) * 0.01
        return (w, al, ar, b)

    params = [
        layer_params(k_params[0:4], in_dim, num_hidden, num_heads[0]),
        layer_params(k_params[4:8], num_hidden * num_heads[0], num_classes, num_heads[-1]),
    ]
    # TODO(synk): feat_drop / attn_drop > 0 (training-mode dropout) not implemented;
    #             rates are 0.0 here so the forward pass is identical to eval mode.

    # block_m=32 exercises the destination-row grid (grid=(2,)) with parallel semantics.
    logits = gat_forward(x, adj, params, block_m=32)
    logits = jax.block_until_ready(logits)
    assert logits.shape == (N, num_classes)

    ref = gat_forward_ref(x, adj, params)
    # bf16 MXU operands + approx reciprocal (per perf review) shift numerics slightly vs
    # the f32 reference, so the tolerance is relaxed from 1e-3 to 2e-2.
    assert jnp.allclose(logits, ref, rtol=2e-2, atol=2e-2), "mismatch vs reference"

    print("KERNEL_OK")
</pallas_src>

<mosaic_0001>
module attributes {stable_mosaic.version = 11 : i64} {
  func.func @_gat_project_kernel(%arg0: memref<64x16xf32, #tpu.memory_space<vmem>>, %arg1: memref<16x68xf32, #tpu.memory_space<vmem>>, %arg2: memref<68x8xf32, #tpu.memory_space<vmem>>, %arg3: memref<1x68xf32, #tpu.memory_space<vmem>>, %arg4: memref<64x68xbf16, #tpu.memory_space<vmem>>, %arg5: memref<64x8xf32, #tpu.memory_space<vmem>>) attributes {dimension_semantics = [], scalar_prefetch = 0 : i64, scratch_operands = 0 : i64, tpu.core_type = #tpu.core_type<tc>} {
    %c0 = arith.constant 0 : index
    %c0_0 = arith.constant 0 : index
    %0 = vector.load %arg0[%c0, %c0_0] : memref<64x16xf32, #tpu.memory_space<vmem>>, vector<64x16xf32>
    %1 = arith.truncf %0 : vector<64x16xf32> to vector<64x16xbf16>
    %c0_1 = arith.constant 0 : index
    %c0_2 = arith.constant 0 : index
    %2 = vector.load %arg1[%c0_1, %c0_2] : memref<16x68xf32, #tpu.memory_space<vmem>>, vector<16x68xf32>
    %3 = arith.truncf %2 : vector<16x68xf32> to vector<16x68xbf16>
    %cst = arith.constant dense<0.000000e+00> : vector<64x68xf32>
    %4 = tpu.matmul %1, %3, %cst {dimension_numbers = #tpu.dot_dimension_numbers<[1], [0], [0], [1], [0, 0, 1, 1], [], []>} : vector<64x16xbf16>, vector<16x68xbf16>, vector<64x68xf32> -> vector<64x68xf32>
    %c0_3 = arith.constant 0 : index
    %c0_4 = arith.constant 0 : index
    %5 = vector.load %arg2[%c0_3, %c0_4] : memref<68x8xf32, #tpu.memory_space<vmem>>, vector<68x8xf32>
    %cst_5 = arith.constant dense<0.000000e+00> : vector<64x8xf32>
    %6 = tpu.matmul %4, %5, %cst_5 {dimension_numbers = #tpu.dot_dimension_numbers<[1], [0], [0], [1], [0, 0, 1, 1], [], []>} : vector<64x68xf32>, vector<68x8xf32>, vector<64x8xf32> -> vector<64x8xf32>
    %c0_6 = arith.constant 0 : index
    %c0_7 = arith.constant 0 : index
    %7 = vector.load %arg5[%c0_6, %c0_7] : memref<64x8xf32, #tpu.memory_space<vmem>>, vector<64x8xf32>
    tpu.vector_store %arg5[%c0_6, %c0_7], %6 {strides = array<i32>} : memref<64x8xf32, #tpu.memory_space<vmem>>, vector<64x8xf32>,
    %c0_8 = arith.constant 0 : index
    %c0_9 = arith.constant 0 : index
    %8 = vector.load %arg3[%c0_8, %c0_9] : memref<1x68xf32, #tpu.memory_space<vmem>>, vector<1x68xf32>
    %9 = vector.broadcast %8 : vector<1x68xf32> to vector<64x68xf32>
    %10 = arith.addf %4, %9 : vector<64x68xf32>
    %11 = arith.truncf %10 : vector<64x68xf32> to vector<64x68xbf16>
    %c0_10 = arith.constant 0 : index
    %c0_11 = arith.constant 0 : index
    %12 = vector.load %arg4[%c0_10, %c0_11] : memref<64x68xbf16, #tpu.memory_space<vmem>>, vector<64x68xbf16>
    tpu.vector_store %arg4[%c0_10, %c0_11], %11 {strides = array<i32>} : memref<64x68xbf16, #tpu.memory_space<vmem>>, vector<64x68xbf16>,
    return
  }
}

</mosaic_0001>

<llo_original>
// kernel: tpu_custom_call.1
$region0: #{tpu_custom_call.1}
  #allocation0 [shape = 'u32[]', space=smem, size = 0x4, offset = 0x4, fixed_abs, tag = 'smem constant byte address 0x4 - core index']
  #allocation1 [shape = 'u32[144,128]{1,0:T(1,128)}', space=vmem, size = 0x12000, scoped, tag = 'internal scratch']
  %s0 = inlined_call_operand.vmem [shape: f32[64,16], index: 0, kind: input, shape index: {}]
  %s1 = inlined_call_operand.vmem [shape: f32[16,68], index: 1, kind: input, shape index: {}]
  %s2 = inlined_call_operand.vmem [shape: f32[68,8], index: 2, kind: input, shape index: {}]
  %s3 = inlined_call_operand.vmem [shape: f32[1,68], index: 3, kind: input, shape index: {}]
  %s4 = inlined_call_operand.hbm [shape: bf16[64,68], index: 4, kind: output, shape index: {0}]
  %s5 = inlined_call_operand.vmem [shape: f32[64,8], index: 5, kind: output, shape index: {1}]
  %6 = xla_tuple %s4, %s5
  %s7 = sld [smem:[#allocation0]]
  $region34: #{tpu_custom_call.1} parent=0
    _
  %s9 = ssub.s32 1, %s7
  %s10 = scalar_select 0, %s9, %s7
  $region1: #{tpu_custom_call.1} parent=0
    #allocation2 [shape = 'u8[16384]{0}', space=vmem, size = 0x4000, scoped, tag = 'output window, operand 0, single buffered']
    #allocation3 [shape = 's32[1]{0}', space=sflag, size = 0x4, scoped, tag = 'scoped memory for tpu_custom_call.1']
    %11 = vsyncpa [#allocation3], 0
    // Predicated region
    $region2: #{tpu_custom_call.1} parent=1 // pred_check
      _
    $region3: #{tpu_custom_call.1} parent=1 // pred_check_branch
      %13 = sbr.rel (0) target = $region5
    $region4: #{tpu_custom_call.1} parent=1 // pred_region
      _
    $region5: #{tpu_custom_call.1} parent=1 // pred_fallthru
      _
    // Predicated region
    $region6: #{tpu_custom_call.1} parent=1 // pred_check
      _
    $region7: #{tpu_custom_call.1} parent=1 // pred_check_branch
      %15 = sbr.rel (0) target = $region9
    $region8: #{tpu_custom_call.1} parent=1 // pred_region
      _
    $region9: #{tpu_custom_call.1} parent=1 // pred_fallthru
      _
    // Predicated region
    $region10: #{tpu_custom_call.1} parent=1 // pred_check
      _
    $region11: #{tpu_custom_call.1} parent=1 // pred_check_branch
      %17 = sbr.rel (0) target = $region13
    $region12: #{tpu_custom_call.1} parent=1 // pred_region
      _
    $region13: #{tpu_custom_call.1} parent=1 // pred_fallthru
      _
    // Predicated region
    $region14: #{tpu_custom_call.1} parent=1 // pred_check
      _
    $region15: #{tpu_custom_call.1} parent=1 // pred_check_branch
      %19 = sbr.rel (0) target = $region17
    $region16: #{tpu_custom_call.1} parent=1 // pred_region
      _
    $region17: #{tpu_custom_call.1} parent=1 // pred_fallthru
      _
    %v21 = vld [vmem:[%s0] sm:$0xff]
    %v22 = vld [vmem:[%s0 + $0x8] sm:$0xff]
    %v23 = vld [vmem:[%s0 + $0x10] sm:$0xff]
    %v24 = vld [vmem:[%s0 + $0x18] sm:$0xff]
    %v25 = vld [vmem:[%s0 + $0x20] sm:$0xff]
    %v26 = vld [vmem:[%s0 + $0x28] sm:$0xff]
    %v27 = vld [vmem:[%s0 + $0x30] sm:$0xff]
    %v28 = vld [vmem:[%s0 + $0x38] sm:$0xff]
    %v29 = vpack.c.bf16 %v22, %v21
    %v30 = vpack.c.bf16 %v24, %v23
    %v31 = vpack.c.bf16 %v26, %v25
    %v32 = vpack.c.bf16 %v28, %v27
    %v33 = vld [vmem:[%s1] sm:$0xff]
    %v34 = vld [vmem:[%s1 + $0x8] sm:$0xff]
    %v35 = vpack.c.bf16 %v34, %v33
    %vm36 = vcmask 130048
    %v38 = vsel %vm36, %v29, 0
    %v41 = vsel %vm36, %v30, 0
    %v44 = vsel %vm36, %v31, 0
    %v47 = vsel %vm36, %v32, 0
    %49 = vmatprep.subr.bf16.mxu0 0
    %50 = vmatpush1.bf16.msra.mxu0 %v35
    %51 = vmatprep.subr.bf16.mxu0 0
    %52 = vmatpush1.bf16.msra.mxu0 0
    %53 = vmatprep.subr.bf16.mxu0 0
    %54 = vmatpush1.bf16.msra.mxu0 0
    %55 = vmatprep.subr.bf16.mxu0 0
    %56 = vmatpush1.bf16.msra.mxu0 0
    %57 = vmatprep.subr.bf16.mxu0 0
    %58 = vmatpush1.bf16.msra.mxu0 0
    %59 = vmatprep.subr.bf16.mxu0 0
    %60 = vmatpush1.bf16.msra.mxu0 0
    %61 = vmatprep.subr.bf16.mxu0 0
    %62 = vmatpush1.bf16.msra.mxu0 0
    %63 = vmatprep.subr.bf16.mxu0 0
    %64 = vmatpush1.bf16.msra.mxu0 0
    %65 = vmatprep.subr.bf16.mxu0 0
    %66 = vmatpush1.bf16.msra.mxu0 0
    %67 = vmatprep.subr.bf16.mxu0 0
    %68 = vmatpush1.bf16.msra.mxu0 0
    %69 = vmatprep.subr.bf16.mxu0 0
    %70 = vmatpush1.bf16.msra.mxu0 0
    %71 = vmatprep.subr.bf16.mxu0 0
    %72 = vmatpush1.bf16.msra.mxu0 0
    %73 = vmatprep.subr.bf16.mxu0 0
    %74 = vmatpush1.bf16.msra.mxu0 0
    %75 = vmatprep.subr.bf16.mxu0 0
    %76 = vmatpush1.bf16.msra.mxu0 0
    %77 = vmatprep.subr.bf16.mxu0 0
    %78 = vmatpush1.bf16.msra.mxu0 0
    %79 = vmatprep.subr.bf16.mxu0 0
    %80 = vmatpush1.bf16.msra.mxu0 0
    %81 = vmatprep.mubr.bf16.mxu0 0
    %82 = vmatmul.mubr.bf16.gmra.mrb[0].mxu0 %v38
    %v83 = vpop.f32.mrb[0].mxu0
    %v84 = vadd.f32 0.0, %v83
    %v85 = vpop.f32.mrb[0].mxu0
    %v86 = vpop.f32.mrb[0].mxu0
    %v87 = vadd.f32 0.0, %v86
    %v88 = vpop.f32.mrb[0].mxu0
    %89 = vmatprep.mubr.bf16.mxu0 0
    %90 = vmatmul.mubr.bf16.gmra.mrb[0].mxu0 %v41
    %v91 = vpop.f32.mrb[0].mxu0
    %v92 = vadd.f32 0.0, %v91
    %v93 = vpop.f32.mrb[0].mxu0
    %v94 = vpop.f32.mrb[0].mxu0
    %v95 = vadd.f32 0.0, %v94
    %v96 = vpop.f32.mrb[0].mxu0
    %97 = vmatprep.mubr.bf16.mxu0 0
    %98 = vmatmul.mubr.bf16.gmra.mrb[0].mxu0 %v44
    %v99 = vpop.f32.mrb[0].mxu0
    %v100 = vadd.f32 0.0, %v99
    %v101 = vpop.f32.mrb[0].mxu0
    %v102 = vpop.f32.mrb[0].mxu0
    %v103 = vadd.f32 0.0, %v102
    %v104 = vpop.f32.mrb[0].mxu0
    %105 = vmatprep.mubr.bf16.mxu0 0
    %106 = vmatmul.mubr.bf16.gmra.mrb[0].mxu0 %v47
    %v107 = vpop.f32.mrb[0].mxu0
    %v108 = vadd.f32 0.0, %v107
    %v109 = vpop.f32.mrb[0].mxu0
    %v110 = vpop.f32.mrb[0].mxu0
    %v111 = vadd.f32 0.0, %v110
    %v112 = vpop.f32.mrb[0].mxu0
    %113 = vdwg.mxu0
    %v114 = vld [vmem:[%s2] sm:$0xff]
    %v115 = vld [vmem:[%s2 + $0x8] sm:$0xff]
    %v116 = vld [vmem:[%s2 + $0x10] sm:$0xff]
    %v117 = vld [vmem:[%s2 + $0x18] sm:$0xff]
    %v118 = vld [vmem:[%s2 + $0x20] sm:$0xff]
    %v119 = vld [vmem:[%s2 + $0x28] sm:$0xff]
    %v120 = vld [vmem:[%s2 + $0x30] sm:$0xff]
    %v121 = vld [vmem:[%s2 + $0x38] sm:$0xff]
    %v122 = vld [vmem:[%s2 + $0x40] sm:$0xf]
    %vm123 = vcmask 556032
    %v125 = vsel %vm123, %v84, 0
    %v128 = vsel %vm123, %v87, 0
    %v131 = vsel %vm123, %v92, 0
    %v134 = vsel %vm123, %v95, 0
    %v137 = vsel %vm123, %v100, 0
    %v140 = vsel %vm123, %v103, 0
    %v143 = vsel %vm123, %v108, 0
    %v146 = vsel %vm123, %v111, 0
    %vm148 = vcmask 1043456
    %v150 = vsel %vm148, %v122, 0
    %152 = vmatprep.subr.mxu0 0.0
    %153 = vmatpush1.msra.mxu0 %v114
    %154 = vmatprep.subr.mxu0 0.0
    %155 = vmatpush1.msra.mxu0 %v115
    %156 = vmatprep.subr.mxu0 0.0
    %157 = vmatpush1.msra.mxu0 %v116
    %158 = vmatprep.subr.mxu0 0.0
    %159 = vmatpush1.msra.mxu0 %v117
    %160 = vmatprep.subr.mxu0 0.0
    %161 = vmatpush1.msra.mxu0 %v118
    %162 = vmatprep.subr.mxu0 0.0
    %163 = vmatpush1.msra.mxu0 %v119
    %164 = vmatprep.subr.mxu0 0.0
    %165 = vmatpush1.msra.mxu0 %v120
    %166 = vmatprep.subr.mxu0 0.0
    %167 = vmatpush1.msra.mxu0 %v121
    %168 = vmatprep.subr.mxu0 0.0
    %169 = vmatpush1.msra.mxu0 %v150
    %170 = vmatprep.subr.mxu0 0.0
    %171 = vmatpush1.msra.mxu0 0.0
    %172 = vmatprep.subr.mxu0 0.0
    %173 = vmatpush1.msra.mxu0 0.0
    %174 = vmatprep.subr.mxu0 0.0
    %175 = vmatpush1.msra.mxu0 0.0
    %176 = vmatprep.subr.mxu0 0.0
    %177 = vmatpush1.msra.mxu0 0.0
    %178 = vmatprep.subr.mxu0 0.0
    %179 = vmatpush1.msra.mxu0 0.0
    %180 = vmatprep.subr.mxu0 0.0
    %181 = vmatpush1.msra.mxu0 0.0
    %182 = vmatprep.subr.mxu0 0.0
    %183 = vmatpush1.msra.mxu0 0.0
    %184 = vmatprep.subr.mxu0 0.0
    %185 = vmatpush1.msra.mxu0 0.0
    %186 = vmatprep.subr.mxu0 0.0
    %187 = vmatpush1.msra.mxu0 0.0
    %188 = vmatprep.subr.mxu0 0.0
    %189 = vmatpush1.msra.mxu0 0.0
    %190 = vmatprep.subr.mxu0 0.0
    %191 = vmatpush1.msra.mxu0 0.0
    %192 = vmatprep.subr.mxu0 0.0
    %193 = vmatpush1.msra.mxu0 0.0
    %194 = vmatprep.subr.mxu0 0.0
    %195 = vmatpush1.msra.mxu0 0.0
    %196 = vmatprep.subr.mxu0 0.0
    %197 = vmatpush1.msra.mxu0 0.0
    %198 = vmatprep.subr.mxu0 0.0
    %199 = vmatpush1.msra.mxu0 0.0
    %200 = vmatprep.subr.mxu0 0.0
    %201 = vmatpush1.msra.mxu0 0.0
    %202 = vmatprep.subr.mxu0 0.0
    %203 = vmatpush1.msra.mxu0 0.0
    %204 = vmatprep.subr.mxu0 0.0
    %205 = vmatpush1.msra.mxu0 0.0
    %206 = vmatprep.subr.mxu0 0.0
    %207 = vmatpush1.msra.mxu0 0.0
    %208 = vmatprep.subr.mxu0 0.0
    %209 = vmatpush1.msra.mxu0 0.0
    %210 = vmatprep.subr.mxu0 0.0
    %211 = vmatpush1.msra.mxu0 0.0
    %212 = vmatprep.subr.mxu0 0.0
    %213 = vmatpush1.msra.mxu0 0.0
    %214 = vmatprep.subr.mxu0 0.0
    %215 = vmatpush1.msra.mxu0 0.0
    %216 = vmatprep.mubr.f32.mxu0 0.0
    %217 = vmatmul.mubr.f32.gmra.mrb[0].mxu0 %v125
    %v218 = vpop.f32.mrb[0].mxu0
    %v219 = vadd.f32 0.0, %v218
    %v220 = vpop.f32.mrb[0].mxu0
    %221 = vmatprep.mubr.f32.mxu0 0.0
    %222 = vmatmul.mubr.f32.gmra.mrb[0].mxu0 %v128
    %v223 = vpop.f32.mrb[0].mxu0
    %v224 = vadd.f32 0.0, %v223
    %v225 = vpop.f32.mrb[0].mxu0
    %226 = vmatprep.mubr.f32.mxu0 0.0
    %227 = vmatmul.mubr.f32.gmra.mrb[0].mxu0 %v131
    %v228 = vpop.f32.mrb[0].mxu0
    %v229 = vadd.f32 0.0, %v228
    %v230 = vpop.f32.mrb[0].mxu0
    %231 = vmatprep.mubr.f32.mxu0 0.0
    %232 = vmatmul.mubr.f32.gmra.mrb[0].mxu0 %v134
    %v233 = vpop.f32.mrb[0].mxu0
    %v234 = vadd.f32 0.0, %v233
    %v235 = vpop.f32.mrb[0].mxu0
    %236 = vmatprep.mubr.f32.mxu0 0.0
    %237 = vmatmul.mubr.f32.gmra.mrb[0].mxu0 %v137
    %v238 = vpop.f32.mrb[0].mxu0
    %v239 = vadd.f32 0.0, %v238
    %v240 = vpop.f32.mrb[0].mxu0
    %241 = vmatprep.mubr.f32.mxu0 0.0
    %242 = vmatmul.mubr.f32.gmra.mrb[0].mxu0 %v140
    %v243 = vpop.f32.mrb[0].mxu0
    %v244 = vadd.f32 0.0, %v243
    %v245 = vpop.f32.mrb[0].mxu0
    %246 = vmatprep.mubr.f32.mxu0 0.0
    %247 = vmatmul.mubr.f32.gmra.mrb[0].mxu0 %v143
    %v248 = vpop.f32.mrb[0].mxu0
    %v249 = vadd.f32 0.0, %v248
    %v250 = vpop.f32.mrb[0].mxu0
    %251 = vmatprep.mubr.f32.mxu0 0.0
    %252 = vmatmul.mubr.f32.gmra.mrb[0].mxu0 %v146
    %v253 = vpop.f32.mrb[0].mxu0
    %v254 = vadd.f32 0.0, %v253
    %v255 = vpop.f32.mrb[0].mxu0
    %256 = vdwg.mxu0
    %vm257 = vcmask 64512
    %258 = vst.msk [vmem:[%s5] sm:$0xff] %vm257, %v219
    %259 = vst.msk [vmem:[%s5 + $0x8] sm:$0xff] %vm257, %v224
    %260 = vst.msk [vmem:[%s5 + $0x10] sm:$0xff] %vm257, %v229
    %261 = vst.msk [vmem:[%s5 + $0x18] sm:$0xff] %vm257, %v234
    %262 = vst.msk [vmem:[%s5 + $0x20] sm:$0xff] %vm257, %v239
    %263 = vst.msk [vmem:[%s5 + $0x28] sm:$0xff] %vm257, %v244
    %264 = vst.msk [vmem:[%s5 + $0x30] sm:$0xff] %vm257, %v249
    %265 = vst.msk [vmem:[%s5 + $0x38] sm:$0xff] %vm257, %v254
    %v266 = vld [vmem:[%s3] sm:$0x1]
    %v268 = vlaneseq
    %v269 = vshrl.u32 %v268, 7
    %v270 = vsub.s32 0, %v269
    %v271 = vrot.slane %v266, %v270
    %v273 = vadd.f32 %v84, %v271
    %v274 = vadd.f32 %v87, %v271
    %v275 = vadd.f32 %v92, %v271
    %v276 = vadd.f32 %v95, %v271
    %v277 = vadd.f32 %v100, %v271
    %v278 = vadd.f32 %v103, %v271
    %v279 = vadd.f32 %v108, %v271
    %v280 = vadd.f32 %v111, %v271
    %v281 = vpack.c.bf16 %v274, %v273
    %v282 = vpack.c.bf16 %v276, %v275
    %v283 = vpack.c.bf16 %v278, %v277
    %v284 = vpack.c.bf16 %v280, %v279
    %v289 = vunpack.c.l.b16 %v281
    %v290 = vunpack.c.h.b16 %v281
    %v291 = vunpack.c.l.b16 %v282
    %v292 = vunpack.c.h.b16 %v282
    %v293 = vunpack.c.l.b16 %v283
    %v294 = vunpack.c.h.b16 %v283
    %v295 = vunpack.c.l.b16 %v284
    %v296 = vunpack.c.h.b16 %v284
    %v297 = vpack.c.b16 %v289, %v289
    %v298 = vpack.c.b16 %v290, %v290
    %v299 = vpack.c.b16 %v291, %v291
    %v300 = vpack.c.b16 %v292, %v292
    %v301 = vpack.c.b16 %v293, %v293
    %v302 = vpack.c.b16 %v294, %v294
    %v303 = vpack.c.b16 %v295, %v295
    %v304 = vpack.c.b16 %v296, %v296
    %vm313 = vcmask 551936
    %314 = vst.msk [vmem:[#allocation2] sm:$0xf] %vm313, %v297
    %315 = vst.msk [vmem:[#allocation2 + $0x4] sm:$0xf] %vm313, %v298
    %316 = vst.msk [vmem:[#allocation2 + $0x8] sm:$0xf] %vm313, %v299
    %317 = vst.msk [vmem:[#allocation2 + $0xc] sm:$0xf] %vm313, %v300
    %318 = vst.msk [vmem:[#allocation2 + $0x10] sm:$0xf] %vm313, %v301
    %319 = vst.msk [vmem:[#allocation2 + $0x14] sm:$0xf] %vm313, %v302
    %320 = vst.msk [vmem:[#allocation2 + $0x18] sm:$0xf] %vm313, %v303
    %321 = vst.msk [vmem:[#allocation2 + $0x1c] sm:$0xf] %vm313, %v304
    // Predicated region
    $region18: #{tpu_custom_call.1} parent=1 // pred_check
      _
    $region19: #{tpu_custom_call.1} parent=1 // pred_check_branch
      %323 = sbr.rel (0) target = $region21
    $region20: #{tpu_custom_call.1} parent=1 // pred_region
      %s325 = ssub.s32 512, 512
      %326 = vsyncadd [#allocation3], %s325
      %s327 = sshll.u32 [#allocation2], 4
      %s328 = int_to_ptr.vmem [resolvable:$true] %s327
      %333 = dma.vmem_to_hbm [thread:$0]  %s328, 512, %s4, [#allocation3], 64, 64, 4
    $region21: #{tpu_custom_call.1} parent=1 // pred_fallthru
      _
    // Predicated region
    $region22: #{tpu_custom_call.1} parent=1 // pred_check
      _
    $region23: #{tpu_custom_call.1} parent=1 // pred_check_branch
      %335 = sbr.rel (0) target = $region25
    $region24: #{tpu_custom_call.1} parent=1 // pred_region
      _
    $region25: #{tpu_custom_call.1} parent=1 // pred_fallthru
      _
    // Predicated region
    $region26: #{tpu_custom_call.1} parent=1 // pred_check
      _
    $region27: #{tpu_custom_call.1} parent=1 // pred_check_branch
      %337 = sbr.rel (0) target = $region29
    $region28: #{tpu_custom_call.1} parent=1 // pred_region
      %338 = dma.done [#allocation3], 512
    $region29: #{tpu_custom_call.1} parent=1 // pred_fallthru
      _
    // Predicated region
    $region30: #{tpu_custom_call.1} parent=1 // pred_check
      _
    $region31: #{tpu_custom_call.1} parent=1 // pred_check_branch
      %340 = sbr.rel (0) target = $region33
    $region32: #{tpu_custom_call.1} parent=1 // pred_region
      _
    $region33: #{tpu_custom_call.1} parent=1 // pred_fallthru
      _
    %341 = vsyncpa [#allocation3], 1

</llo_original>
